<compile_context>
chip_gen: v7x
topology: tpu7x:2x2x1
jax: 0.10.0
libtpu: 0.0.40
codegen_flags: <defaults>
</compile_context>

<pallas_src>
import functools

import jax
import jax.numpy as jnp
from jax.experimental import pallas as pl
from jax.experimental.pallas import tpu as pltpu


_TARGET_BLOCK_BYTES = 2 << 20      # ~2 MiB per (tb, Z) activation block
_MAX_BATCH_TILE = 4096


def _pick_batch_tile(batch, z_dim, itemsize):
    """Largest 8-aligned row tile within the ~2 MiB block budget (<= batch)."""
    if batch <= 8:
        return batch                         # block == full array (always legal)
    tb = _TARGET_BLOCK_BYTES // max(1, z_dim * itemsize)
    tb = min(tb, _MAX_BATCH_TILE, batch)
    tb = max(8, (tb // 8) * 8)
    return tb


def _vmem_limit_bytes(*buffer_bytes):
    """Explicit scoped-VMEM limit: actual footprint + headroom, clamped."""
    total = sum(int(b) for b in buffer_bytes) + (4 << 20)
    return int(min(max(total, 8 << 20), 64 << 20))


# ----------------------------- forward kernel -------------------------------
def _forward_kernel(z_ref, sigma_ref, mu_ref, z_next_ref):
    z_next_ref[...] = (sigma_ref[...] * z_ref[...] + mu_ref[...]).astype(
        z_next_ref.dtype)


def masked_linear_ar_forward(z, sigma, mu, *, block_rows=None):
    """forward(z): z_next = sigma * z + mu, logdet = sum(log(sigma))."""
    B, Z = z.shape
    itemsize = jnp.dtype(z.dtype).itemsize
    tb = block_rows if block_rows is not None else _pick_batch_tile(B, Z, itemsize)
    grid = (pl.cdiv(B, tb),)
    row_spec = pl.BlockSpec((tb, Z), lambda i: (i, 0))
    vec_spec = pl.BlockSpec((1, Z), lambda i: (0, 0))
    vmem = _vmem_limit_bytes(
        2 * tb * Z * itemsize,     # z tiles, double-buffered
        2 * tb * Z * itemsize,     # z_next tiles, double-buffered
        2 * 2 * Z * 4)             # sigma + mu vectors
    z_next = pl.pallas_call(
        _forward_kernel,
        out_shape=jax.ShapeDtypeStruct((B, Z), z.dtype),
        grid=grid,
        in_specs=[row_spec, vec_spec, vec_spec],
        out_specs=row_spec,
        compiler_params=pltpu.CompilerParams(
            dimension_semantics=("parallel",),     # v7x: batch shards over 2 TCs
            vmem_limit_bytes=vmem),
    )(z, sigma.reshape(1, Z).astype(jnp.float32),
       mu.reshape(1, Z).astype(jnp.float32))
    # Loop-invariant scalar: cheap length-Z reduce, done outside the kernel so
    # the grid axis can be "parallel" without a resident-scalar race.
    log_det_jacobian = jnp.sum(jnp.log(sigma.astype(jnp.float32)))
    return z_next, log_det_jacobian


# ----------------------------- inverse kernels ------------------------------
def prepare_inverse_params(w_mu, b_mu, w_sigma, b_sigma, *,
                           mxu_dtype=jnp.float32):
    """Loop-invariant weight prep (strictly-lower mask, concat, cast).

    Cache the result per weight update: rebuilding it per inverse() call costs
    ~3x the kernel's own weight HBM traffic at small batches.
    mxu_dtype=jnp.bfloat16 halves the weight/activation read stream on
    v5e/v6e/v7x (f32 accumulate + f32 epilogue kept); it changes mu/sigma
    numerics vs the f32 PyTorch reference, so it is opt-in.
    """
    Z = w_mu.shape[0]
    mask = jnp.tril(jnp.ones((Z, Z), w_mu.dtype), -1)
    wm = (w_mu * mask).astype(mxu_dtype)
    ws = (w_sigma * mask).astype(mxu_dtype)
    fused = (Z % 128 == 0)
    if fused:
        # One (Z, 2Z) MXU operand: columns [0:Z] -> mu preact, [Z:2Z] -> sigma.
        weights = (jnp.concatenate([wm, ws], axis=1),)
        biases = (jnp.concatenate([b_mu, b_sigma]).reshape(1, 2 * Z)
                  .astype(jnp.float32),)
    else:
        # Small / odd Z: two separate dots avoid lane-crossing column slices
        # and sub-128-lane masked stores of a (tb, 2Z) slab.
        weights = (wm, ws)
        biases = (b_mu.reshape(1, Z).astype(jnp.float32),
                  b_sigma.reshape(1, Z).astype(jnp.float32))
    return dict(z_dim=Z, fused=fused, mxu_dtype=mxu_dtype,
                weights=weights, biases=biases)


def _fused_inverse_math(z, w_cat, b_cat, z_dim, mxu_dtype):
    acc = jnp.dot(z.astype(mxu_dtype), w_cat,
                  preferred_element_type=jnp.float32) + b_cat
    mu = acc[:, :z_dim]
    sigma = jax.nn.sigmoid(acc[:, z_dim:])
    # Exact division: kernel is HBM-bound, the VPU/EUP slack covers it.
    z_prev = (z.astype(jnp.float32) - mu) / sigma
    return z_prev, mu, sigma


def _inverse_fused_full_kernel(z_ref, w_ref, b_ref, zprev_ref, musig_ref, *,
                               z_dim, mxu_dtype):
    z_prev, mu, sigma = _fused_inverse_math(
        z_ref[...], w_ref[...], b_ref[...], z_dim, mxu_dtype)
    zprev_ref[...] = z_prev.astype(zprev_ref.dtype)
    # Lane-dense (tb, 2Z) slab: Z % 128 == 0, both stores are 128-aligned.
    musig_ref[:, :z_dim] = mu
    musig_ref[:, z_dim:] = sigma


def _inverse_fused_zonly_kernel(z_ref, w_ref, b_ref, zprev_ref, *,
                                z_dim, mxu_dtype):
    z_prev, _, _ = _fused_inverse_math(
        z_ref[...], w_ref[...], b_ref[...], z_dim, mxu_dtype)
    zprev_ref[...] = z_prev.astype(zprev_ref.dtype)


def _split_inverse_math(z, wm, bm, ws, bs, mxu_dtype):
    zc = z.astype(mxu_dtype)
    mu = jnp.dot(zc, wm, preferred_element_type=jnp.float32) + bm
    sigma = jax.nn.sigmoid(
        jnp.dot(zc, ws, preferred_element_type=jnp.float32) + bs)
    z_prev = (z.astype(jnp.float32) - mu) / sigma
    return z_prev, mu, sigma


def _inverse_split_full_kernel(z_ref, wm_ref, bm_ref, ws_ref, bs_ref,
                               zprev_ref, mu_ref, sigma_ref, *, mxu_dtype):
    z_prev, mu, sigma = _split_inverse_math(
        z_ref[...], wm_ref[...], bm_ref[...], ws_ref[...], bs_ref[...],
        mxu_dtype)
    zprev_ref[...] = z_prev.astype(zprev_ref.dtype)
    mu_ref[...] = mu
    sigma_ref[...] = sigma


def _inverse_split_zonly_kernel(z_ref, wm_ref, bm_ref, ws_ref, bs_ref,
                                zprev_ref, *, mxu_dtype):
    z_prev, _, _ = _split_inverse_math(
        z_ref[...], wm_ref[...], bm_ref[...], ws_ref[...], bs_ref[...],
        mxu_dtype)
    zprev_ref[...] = z_prev.astype(zprev_ref.dtype)


def masked_linear_ar_inverse(z, params, *, return_mu_sigma=True,
                             block_rows=None):
    """inverse(z) with prepared params (see prepare_inverse_params).

    return_mu_sigma=False drops 2/3 of the store-side HBM traffic -- preferred
    on v5e (lowest HBM BW, single vst slot) when residuals aren't needed.
    """
    B, Z = z.shape
    assert params["z_dim"] == Z, "params were prepared for a different z_dim"
    mxu_dtype = params["mxu_dtype"]
    itemsize = jnp.dtype(z.dtype).itemsize
    tb = block_rows if block_rows is not None else _pick_batch_tile(B, Z, itemsize)
    grid = (pl.cdiv(B, tb),)
    row_spec = pl.BlockSpec((tb, Z), lambda i: (i, 0))

    # Constant-index (resident) operands are fetched once; a second pipeline
    # buffer is wasted VMEM -> single-buffer them.
    def const_spec(shape):
        return pl.BlockSpec(shape, lambda i: (0, 0),
                            pipeline_mode=pl.Buffered(1))

    weights, biases = params["weights"], params["biases"]
    weight_bytes = sum(int(w.size) * jnp.dtype(w.dtype).itemsize for w in weights)
    bias_bytes = sum(int(b.size) * 4 for b in biases)
    z_bytes = 2 * tb * Z * itemsize            # double-buffered z tiles

    def cparams(out_bytes):
        return pltpu.CompilerParams(
            dimension_semantics=("parallel",),
            vmem_limit_bytes=_vmem_limit_bytes(
                z_bytes, weight_bytes, bias_bytes, out_bytes))

    if params["fused"]:
        (w_cat,), (b_cat,) = weights, biases
        in_specs = [row_spec, const_spec((Z, 2 * Z)), const_spec((1, 2 * Z))]
        operands = (z, w_cat, b_cat)
        if return_mu_sigma:
            out_bytes = 2 * tb * Z * 4 + 2 * tb * 2 * Z * 4
            z_prev, musig = pl.pallas_call(
                functools.partial(_inverse_fused_full_kernel,
                                  z_dim=Z, mxu_dtype=mxu_dtype),
                out_shape=(jax.ShapeDtypeStruct((B, Z), jnp.float32),
                           jax.ShapeDtypeStruct((B, 2 * Z), jnp.float32)),
                grid=grid,
                in_specs=in_specs,
                out_specs=(row_spec, pl.BlockSpec((tb, 2 * Z), lambda i: (i, 0))),
                compiler_params=cparams(out_bytes),
            )(*operands)
            return z_prev, musig[:, :Z], musig[:, Z:]
        out_bytes = 2 * tb * Z * 4
        return pl.pallas_call(
            functools.partial(_inverse_fused_zonly_kernel,
                              z_dim=Z, mxu_dtype=mxu_dtype),
            out_shape=jax.ShapeDtypeStruct((B, Z), jnp.float32),
            grid=grid, in_specs=in_specs, out_specs=row_spec,
            compiler_params=cparams(out_bytes),
        )(*operands)

    wm, ws = weights
    bm, bs = biases
    in_specs = [row_spec, const_spec((Z, Z)), const_spec((1, Z)),
                const_spec((Z, Z)), const_spec((1, Z))]
    operands = (z, wm, bm, ws, bs)
    if return_mu_sigma:
        out_bytes = 3 * 2 * tb * Z * 4
        z_prev, mu, sigma = pl.pallas_call(
            functools.partial(_inverse_split_full_kernel, mxu_dtype=mxu_dtype),
            out_shape=tuple(jax.ShapeDtypeStruct((B, Z), jnp.float32)
                            for _ in range(3)),
            grid=grid, in_specs=in_specs,
            out_specs=(row_spec, row_spec, row_spec),
            compiler_params=cparams(out_bytes),
        )(*operands)
        return z_prev, mu, sigma
    out_bytes = 2 * tb * Z * 4
    return pl.pallas_call(
        functools.partial(_inverse_split_zonly_kernel, mxu_dtype=mxu_dtype),
        out_shape=jax.ShapeDtypeStruct((B, Z), jnp.float32),
        grid=grid, in_specs=in_specs, out_specs=row_spec,
        compiler_params=cparams(out_bytes),
    )(*operands)


def masked_linear_ar_inverse_from_weights(z, w_mu, b_mu, w_sigma, b_sigma,
                                          **kwargs):
    """Convenience one-shot wrapper (prefer caching prepare_inverse_params)."""
    mxu_dtype = kwargs.pop("mxu_dtype", jnp.float32)
    params = prepare_inverse_params(w_mu, b_mu, w_sigma, b_sigma,
                                    mxu_dtype=mxu_dtype)
    return masked_linear_ar_inverse(z, params, **kwargs)


# --------------------------------- tests -------------------------------------
if __name__ == "__main__":
    key = jax.random.PRNGKey(0)

    def make_inputs(k, B, Z):
        ks = jax.random.split(k, 7)
        xavier_std = (2.0 / (Z + Z)) ** 0.5           # matches xavier_normal_
        w_mu = xavier_std * jax.random.normal(ks[0], (Z, Z), jnp.float32)
        b_mu = jax.random.uniform(ks[1], (Z,), jnp.float32, 0.0, 1.0)
        w_sigma = xavier_std * jax.random.normal(ks[2], (Z, Z), jnp.float32)
        b_sigma = jax.random.uniform(ks[3], (Z,), jnp.float32, 0.0, 1.0)
        z = jax.random.normal(ks[4], (B, Z), jnp.float32)
        sigma_t = jax.random.uniform(ks[5], (Z,), jnp.float32, 0.5, 1.5)
        mu_t = jax.random.normal(ks[6], (Z,), jnp.float32)
        return z, w_mu, b_mu, w_sigma, b_sigma, sigma_t, mu_t

    def forward_ref(z, sigma, mu):
        return sigma * z + mu, jnp.sum(jnp.log(sigma))

    def inverse_ref(z, w_mu, b_mu, w_sigma, b_sigma):
        Z = z.shape[1]
        mask = jnp.tril(jnp.ones((Z, Z), jnp.float32), -1)
        mu = z @ (w_mu * mask) + b_mu
        sigma = jax.nn.sigmoid(z @ (w_sigma * mask) + b_sigma)
        return (z - mu) / sigma, mu, sigma

    ks = jax.random.split(key, 3)

    # ---- case 1: module's toy shapes (B=4, Z=32) — split path, single block --
    B, Z = 4, 32
    z, w_mu, b_mu, w_sigma, b_sigma, sigma_t, mu_t = make_inputs(ks[0], B, Z)

    # forward with the __init__ buffers (mu = zeros, sigma = ones)
    z_next, logdet = masked_linear_ar_forward(
        z, jnp.ones((Z,), jnp.float32), jnp.zeros((Z,), jnp.float32))
    jax.block_until_ready((z_next, logdet))
    assert jnp.allclose(z_next, z, atol=1e-6)
    assert jnp.allclose(logdet, 0.0, atol=1e-6)

    # forward with non-trivial sigma/mu
    z_next, logdet = masked_linear_ar_forward(z, sigma_t, mu_t)
    z_next_r, logdet_r = forward_ref(z, sigma_t, mu_t)
    assert jnp.allclose(z_next, z_next_r, atol=1e-6, rtol=1e-6)
    assert jnp.allclose(logdet, logdet_r, atol=1e-5)

    # inverse (two-dot path, Z % 128 != 0), full outputs
    params32 = prepare_inverse_params(w_mu, b_mu, w_sigma, b_sigma)
    z_prev, mu_i, sigma_i = masked_linear_ar_inverse(z, params32)
    jax.block_until_ready((z_prev, mu_i, sigma_i))
    z_prev_r, mu_r, sigma_r = inverse_ref(z, w_mu, b_mu, w_sigma, b_sigma)
    assert jnp.allclose(mu_i, mu_r, atol=1e-4, rtol=1e-4)
    assert jnp.allclose(sigma_i, sigma_r, atol=1e-4, rtol=1e-4)
    assert jnp.allclose(z_prev, z_prev_r, atol=1e-3, rtol=1e-3)   # exact division
    assert jnp.allclose(z_prev, (z - mu_i) / sigma_i, atol=1e-5, rtol=1e-5)

    z_prev_only = masked_linear_ar_inverse(z, params32, return_mu_sigma=False)
    assert jnp.allclose(z_prev_only, z_prev, atol=1e-6)

    # ---- case 2: cdiv grid with a masked partial last tile (B=20, tb=8) ------
    B = 20
    z2 = jax.random.normal(ks[1], (B, Z), jnp.float32)
    z_next, _ = masked_linear_ar_forward(z2, sigma_t, mu_t, block_rows=8)
    z_next_r, _ = forward_ref(z2, sigma_t, mu_t)
    assert jnp.allclose(z_next, z_next_r, atol=1e-6, rtol=1e-6)

    z_prev, mu_i, sigma_i = masked_linear_ar_inverse(z2, params32, block_rows=8)
    z_prev_r, mu_r, sigma_r = inverse_ref(z2, w_mu, b_mu, w_sigma, b_sigma)
    assert jnp.allclose(mu_i, mu_r, atol=1e-4, rtol=1e-4)
    assert jnp.allclose(sigma_i, sigma_r, atol=1e-4, rtol=1e-4)
    assert jnp.allclose(z_prev, z_prev_r, atol=1e-3, rtol=1e-3)

    # ---- case 3: fused lane-dense path (Z=128, Z % 128 == 0), pipelined grid -
    B, Z = 256, 128
    z3, w_mu, b_mu, w_sigma, b_sigma, sigma_t, mu_t = make_inputs(ks[2], B, Z)
    z_next, logdet = masked_linear_ar_forward(z3, sigma_t, mu_t)
    z_next_r, logdet_r = forward_ref(z3, sigma_t, mu_t)
    assert jnp.allclose(z_next, z_next_r, atol=1e-6, rtol=1e-6)
    assert jnp.allclose(logdet, logdet_r, atol=1e-4)

    params128 = prepare_inverse_params(w_mu, b_mu, w_sigma, b_sigma)
    z_prev, mu_i, sigma_i = masked_linear_ar_inverse(z3, params128, block_rows=64)
    jax.block_until_ready((z_prev, mu_i, sigma_i))
    z_prev_r, mu_r, sigma_r = inverse_ref(z3, w_mu, b_mu, w_sigma, b_sigma)
    # Tolerance covers MXU-vs-XLA f32 dot algorithm differences at K=128; the
    # epilogue itself is exact (see self-consistency check below).
    assert jnp.allclose(mu_i, mu_r, atol=2e-2, rtol=2e-2)
    assert jnp.allclose(sigma_i, sigma_r, atol=2e-2, rtol=2e-2)
    assert jnp.allclose(z_prev, z_prev_r, atol=5e-2, rtol=5e-2)
    assert jnp.allclose(z_prev, (z3 - mu_i) / sigma_i, atol=1e-5, rtol=1e-5)

    z_prev_only = masked_linear_ar_inverse(z3, params128, return_mu_sigma=False)
    assert jnp.allclose(z_prev_only, z_prev, atol=1e-6)

    print("KERNEL_OK")
</pallas_src>

<mosaic_0001>
module attributes {stable_mosaic.version = 11 : i64} {
  func.func @_forward_kernel(%arg0: i32, %arg1: memref<4x32xf32, #tpu.memory_space<vmem>>, %arg2: memref<1x32xf32, #tpu.memory_space<vmem>>, %arg3: memref<1x32xf32, #tpu.memory_space<vmem>>, %arg4: memref<4x32xf32, #tpu.memory_space<vmem>>) attributes {dimension_semantics = [#tpu.dimension_semantics<parallel>], iteration_bounds = array<i64: 1>, scalar_prefetch = 0 : i64, scratch_operands = 0 : i64, tpu.core_type = #tpu.core_type<tc>, window_params = [{transform_indices = @transform_0, window_bounds = array<i64: 4, 32>}, {pipeline_mode = #tpu.pipeline_mode<synchronous>, transform_indices = @transform_1, window_bounds = array<i64: 1, 32>}, {pipeline_mode = #tpu.pipeline_mode<synchronous>, transform_indices = @transform_2, window_bounds = array<i64: 1, 32>}, {transform_indices = @transform_3, window_bounds = array<i64: 4, 32>}]} {
    %c0 = arith.constant 0 : index
    %c0_0 = arith.constant 0 : index
    %0 = vector.load %arg2[%c0, %c0_0] : memref<1x32xf32, #tpu.memory_space<vmem>>, vector<1x32xf32>
    %c0_1 = arith.constant 0 : index
    %c0_2 = arith.constant 0 : index
    %1 = vector.load %arg1[%c0_1, %c0_2] : memref<4x32xf32, #tpu.memory_space<vmem>>, vector<4x32xf32>
    %2 = vector.broadcast %0 : vector<1x32xf32> to vector<4x32xf32>
    %3 = arith.mulf %2, %1 : vector<4x32xf32>
    %c0_3 = arith.constant 0 : index
    %c0_4 = arith.constant 0 : index
    %4 = vector.load %arg3[%c0_3, %c0_4] : memref<1x32xf32, #tpu.memory_space<vmem>>, vector<1x32xf32>
    %5 = vector.broadcast %4 : vector<1x32xf32> to vector<4x32xf32>
    %6 = arith.addf %3, %5 : vector<4x32xf32>
    %c0_5 = arith.constant 0 : index
    %c0_6 = arith.constant 0 : index
    %7 = vector.load %arg4[%c0_5, %c0_6] : memref<4x32xf32, #tpu.memory_space<vmem>>, vector<4x32xf32>
    tpu.vector_store %arg4[%c0_5, %c0_6], %6 {strides = array<i32>} : memref<4x32xf32, #tpu.memory_space<vmem>>, vector<4x32xf32>,
    return
  }
  func.func @transform_0(%arg0: i32) -> (i32, i32) {
    %c0_i32 = arith.constant 0 : i32
    %c0_i32_0 = arith.constant 0 : i32
    return %arg0, %c0_i32 : i32, i32
  }
  func.func @transform_1(%arg0: i32) -> (i32, i32) {
    %c0_i32 = arith.constant 0 : i32
    %c0_i32_0 = arith.constant 0 : i32
    %c0_i32_1 = arith.constant 0 : i32
    return %c0_i32, %c0_i32_0 : i32, i32
  }
  func.func @transform_2(%arg0: i32) -> (i32, i32) {
    %c0_i32 = arith.constant 0 : i32
    %c0_i32_0 = arith.constant 0 : i32
    %c0_i32_1 = arith.constant 0 : i32
    return %c0_i32, %c0_i32_0 : i32, i32
  }
  func.func @transform_3(%arg0: i32) -> (i32, i32) {
    %c0_i32 = arith.constant 0 : i32
    %c0_i32_0 = arith.constant 0 : i32
    return %arg0, %c0_i32 : i32, i32
  }
}

</mosaic_0001>

<llo_original>
// kernel: tpu_custom_call.1
$region0: #{tpu_custom_call.1}
  #allocation0 [shape = 'u32[]', space=smem, size = 0x4, offset = 0x4, fixed_abs, tag = 'smem constant byte address 0x4 - core index']
  #allocation1 [shape = 'u32[144,128]{1,0:T(1,128)}', space=vmem, size = 0x12000, scoped, tag = 'internal scratch']
  %s0 = inlined_call_operand.hbm [shape: f32[4,32], index: 0, kind: input, shape index: {}]
  %s1 = inlined_call_operand.vmem [shape: f32[1,32], index: 1, kind: input, shape index: {}]
  %s2 = inlined_call_operand.vmem [shape: f32[1,32], index: 2, kind: input, shape index: {}]
  %s3 = inlined_call_operand.hbm [shape: f32[4,32], index: 3, kind: output, shape index: {}]
  %s4 = sld [smem:[#allocation0]]
  $region26: #{tpu_custom_call.1} parent=0
    _
  %s6 = ssub.s32 1, %s4
  %s7 = scalar_select 0, %s6, %s4
  $region1: #{tpu_custom_call.1} parent=0
    #allocation2 [shape = 'u8[2048]{0}', space=vmem, size = 0x800, scoped, tag = 'input window, operand 0, single buffered']
    #allocation3 [shape = 's32[1]{0}', space=sflag, size = 0x4, scoped, tag = 'scoped memory for tpu_custom_call.1']
    #allocation4 [shape = 's32[1]{0}', space=sflag, size = 0x4, scoped, tag = 'scoped memory for tpu_custom_call.1']
    #allocation5 [shape = 'u8[2048]{0}', space=vmem, size = 0x800, scoped, tag = 'output window, operand 0, single buffered']
    %8 = vsyncpa [#allocation3], 0
    %9 = vsyncpa [#allocation4], 0
    // Predicated region
    $region2: #{tpu_custom_call.1} parent=1 // pred_check
      _
    $region3: #{tpu_custom_call.1} parent=1 // pred_check_branch
      %11 = sbr.rel (0) target = $region5
    $region4: #{tpu_custom_call.1} parent=1 // pred_region
      %s13 = ssub.s32 64, 64
      %14 = vsyncadd [#allocation3], %s13
      %s16 = sshll.u32 [#allocation2], 4
      %s17 = int_to_ptr.vmem [resolvable:$true] %s16
      %19 = dma.hbm_to_vmem [thread:$0]  %s0, 64, %s17, [#allocation3]
    $region5: #{tpu_custom_call.1} parent=1 // pred_fallthru
      _
    // Predicated region
    $region6: #{tpu_custom_call.1} parent=1 // pred_check
      _
    $region7: #{tpu_custom_call.1} parent=1 // pred_check_branch
      %21 = sbr.rel (0) target = $region9
    $region8: #{tpu_custom_call.1} parent=1 // pred_region
      _
    $region9: #{tpu_custom_call.1} parent=1 // pred_fallthru
      _
    // Predicated region
    $region10: #{tpu_custom_call.1} parent=1 // pred_check
      _
    $region11: #{tpu_custom_call.1} parent=1 // pred_check_branch
      %23 = sbr.rel (0) target = $region13
    $region12: #{tpu_custom_call.1} parent=1 // pred_region
      _
    $region13: #{tpu_custom_call.1} parent=1 // pred_fallthru
      _
    // Predicated region
    $region14: #{tpu_custom_call.1} parent=1 // pred_check
      _
    $region15: #{tpu_custom_call.1} parent=1 // pred_check_branch
      %25 = sbr.rel (0) target = $region17
    $region16: #{tpu_custom_call.1} parent=1 // pred_region
      %26 = dma.done [#allocation3], 64
    $region17: #{tpu_custom_call.1} parent=1 // pred_fallthru
      _
    %v27 = vld [vmem:[%s1] sm:$0x1]
    %v28 = vld [vmem:[#allocation2] sm:$0xf]
    %v30 = vlaneseq
    %v31 = vshrl.u32 %v30, 7
    %v32 = vsub.s32 0, %v31
    %v33 = vrot.slane %v27, %v32
    %v35 = vmul.f32 %v33, %v28
    %v36 = vld [vmem:[%s2] sm:$0x1]
    %v38 = vlaneseq
    %v39 = vshrl.u32 %v38, 7
    %v40 = vsub.s32 0, %v39
    %v41 = vrot.slane %v36, %v40
    %v43 = vadd.f32 %v35, %v41
    %vm44 = vcmask 257024
    %45 = vst.msk [vmem:[#allocation5] sm:$0xf] %vm44, %v43
    // Predicated region
    $region18: #{tpu_custom_call.1} parent=1 // pred_check
      _
    $region19: #{tpu_custom_call.1} parent=1 // pred_check_branch
      %47 = sbr.rel (0) target = $region21
    $region20: #{tpu_custom_call.1} parent=1 // pred_region
      %s49 = ssub.s32 64, 64
      %50 = vsyncadd [#allocation4], %s49
      %s52 = sshll.u32 [#allocation5], 4
      %s53 = int_to_ptr.vmem [resolvable:$true] %s52
      %55 = dma.vmem_to_hbm [thread:$0]  %s53, 64, %s3, [#allocation4]
    $region21: #{tpu_custom_call.1} parent=1 // pred_fallthru
      _
    // Predicated region
    $region22: #{tpu_custom_call.1} parent=1 // pred_check
      _
    $region23: #{tpu_custom_call.1} parent=1 // pred_check_branch
      %57 = sbr.rel (0) target = $region25
    $region24: #{tpu_custom_call.1} parent=1 // pred_region
      %58 = dma.done [#allocation4], 64
    $region25: #{tpu_custom_call.1} parent=1 // pred_fallthru
      _
    %59 = vsyncpa [#allocation3], 1
    %60 = vsyncpa [#allocation4], 1

</llo_original>
